<compile_context>
chip_gen: v5e
topology: v5e:2x2
jax: 0.10.0
libtpu: 0.0.40
codegen_flags: <defaults>
</compile_context>

<pallas_src>
import functools

import jax
import jax.numpy as jnp
from jax.experimental import pallas as pl
from jax.experimental.pallas import tpu as pltpu


def _std_loss_kernel(x_ref, o_ref, acc_ref, *, img_h, img_w, inv_denom):
    step = pl.program_id(0)

    @pl.when(step == 0)
    def _init():
        acc_ref[...] = jnp.zeros_like(acc_ref)

    _, c, hh, ww = x_ref.shape

    # GrayscaleLayer: channel SUM in f32 (the 1/C factor -- squared -- is folded
    # into inv_denom).  Per-channel 2-D slices so the cast never materializes a
    # full f32 copy of the 4-D block.
    gray = x_ref[0, 0].astype(jnp.float32)
    for ci in range(1, c):
        gray = gray + x_ref[0, ci].astype(jnp.float32)

    # Separable 5x5 box sum with a symmetric window {-2..+2} around the centre,
    # realized with pltpu.roll (XLU slot) instead of misaligned shift-slices.
    # Each (d, hh-d)/(d, ww-d) roll pair covers the +d and -d shifts regardless
    # of roll direction convention; wrapped rows/cols are masked out below.
    hs = gray
    for d in (1, 2):
        hs = hs + pltpu.roll(gray, shift=d, axis=0) \
                + pltpu.roll(gray, shift=hh - d, axis=0)
    bs = hs
    for d in (1, 2):
        bs = bs + pltpu.roll(hs, shift=d, axis=1) \
                + pltpu.roll(hs, shift=ww - d, axis=1)

    # conv2d(gray, image) with the delta at (2,2) is, in this centred
    # formulation, just `gray` itself at the valid centre positions.
    # Valid centres per packed (img_h, img_w) image: 2 <= local row/col <= size-3.
    row = jax.lax.broadcasted_iota(jnp.int32, (hh, ww), 0) % img_h
    col = jax.lax.broadcasted_iota(jnp.int32, (hh, ww), 1) % img_w
    valid = (row >= 2) & (row < img_h - 2) & (col >= 2) & (col < img_w - 2)

    diff = jnp.where(valid, gray - bs * (1.0 / 25.0), 0.0)
    acc_ref[...] += diff * diff          # vector accumulator; no per-step reduce

    @pl.when(step == pl.num_programs(0) - 1)
    def _finalize():
        # Single cross-lane/sublane reduction for the whole kernel.
        o_ref[...] = jnp.sum(acc_ref[...], keepdims=True) * inv_denom


def std_loss(x, *, target_block_bytes=4 * 1024 * 1024):
    """StdLoss forward. x: (N, C, H, W) float array. Returns scalar float32 loss."""
    n, c, h, w = x.shape
    if h < 5 or w < 5:
        raise ValueError("StdLoss requires H >= 5 and W >= 5 (valid 5x5 conv).")
    ho, wo = h - 4, w - 4
    itemsize = jnp.dtype(x.dtype).itemsize

    # Lane-dense packing factor: fold g images side by side along W so the minor
    # dim is ~128 lanes (W=16 -> g=8 -> 128).  g=1 when W is already lane-dense.
    g = 1 if w >= 128 else -(-128 // w)

    # Batch tiling: bt packed rows (of g images each) per grid step, sized toward
    # ~target_block_bytes DMAs.  Double-buffered input (2 x ~4 MiB) plus the f32
    # accumulator stays well inside the 32 MiB scoped-VMEM budget on v5e/v6e/v7x.
    row_bytes = c * h * (g * w) * itemsize           # bytes per bt-unit
    bt = max(1, target_block_bytes // row_bytes)
    bt = int(min(bt, -(-n // g)))                    # no more rows than the batch fills
    bt = max(bt, 1)
    ipb = bt * g                                     # images per grid step
    n_pad = -(-n // ipb) * ipb                       # zero-padded images contribute 0
    nb = n_pad // ipb
    hh, ww = bt * h, g * w

    xp = x if n_pad == n else jnp.pad(x, ((0, n_pad - n), (0, 0), (0, 0), (0, 0)))
    # (n_pad, C, H, W) -> (nb, C, bt*H, g*W); image (blk, t, j) lands at rows
    # [t*H, (t+1)*H) x cols [j*W, (j+1)*W).  Pure layout plumbing, done once by XLA.
    xp = xp.reshape(nb, bt, g, c, h, w).transpose(0, 3, 1, 4, 2, 5)
    xp = xp.reshape(nb, c, hh, ww)

    # Folds GrayscaleLayer's 1/C (squared, since it scales the diff) and the
    # MSELoss mean over N*Ho*Wo output elements (real N, not the padded N).
    inv_denom = 1.0 / (float(c) * float(c) * float(n) * float(ho) * float(wo))
    kernel = functools.partial(_std_loss_kernel, img_h=h, img_w=w,
                               inv_denom=inv_denom)

    # Rough roofline hints (memory-bound reduction; MXU intentionally unused).
    flops = nb * hh * ww * (c - 1 + 8 + 4)
    bytes_accessed = xp.size * itemsize + 4

    out = pl.pallas_call(
        kernel,
        out_shape=jax.ShapeDtypeStruct((1, 1), jnp.float32),
        grid_spec=pltpu.PrefetchScalarGridSpec(
            num_scalar_prefetch=0,
            grid=(nb,),
            # One multi-image slab per grid step; DMA for step i+1 overlaps
            # compute on step i.  (If xprof ever shows exposed DMA, bump to
            # pipeline_mode=pl.Buffered(3) — not needed by default.)
            in_specs=[pl.BlockSpec((1, c, hh, ww), lambda i: (i, 0, 0, 0))],
            out_specs=pl.BlockSpec((1, 1), lambda i: (0, 0)),
            scratch_shapes=[pltpu.VMEM((hh, ww), jnp.float32)],
        ),
        compiler_params=pltpu.CompilerParams(
            # The batch axis accumulates into a shared scratch -> reduction axis.
            dimension_semantics=("arbitrary",),
            # Portable across v5e (16 MiB scoped default) / v6e / v7x (64 MiB
            # physical); on v6e this could be raised with a larger block.
            vmem_limit_bytes=32 * 1024 * 1024,
        ),
        cost_estimate=pl.CostEstimate(
            flops=flops, transcendentals=0, bytes_accessed=bytes_accessed),
    )(xp)
    return out[0, 0]


def _std_loss_ref(x):
    # Pure-JAX reference mirroring the PyTorch module.
    x = x.astype(jnp.float32)
    gray = jnp.mean(x, axis=1)
    n, h, w = gray.shape
    ho, wo = h - 4, w - 4
    center = gray[:, 2:2 + ho, 2:2 + wo]
    acc = jnp.zeros((n, ho, wo), jnp.float32)
    for di in range(5):
        for dj in range(5):
            acc = acc + gray[:, di:di + ho, dj:dj + wo]
    blur = acc / 25.0
    return jnp.mean((center - blur) ** 2)


if __name__ == "__main__":
    key = jax.random.PRNGKey(0)
    x = jax.random.normal(key, (2, 4, 16, 16), dtype=jnp.float32)

    loss = jax.jit(std_loss)(x)
    jax.block_until_ready(loss)

    ref = _std_loss_ref(x)
    assert jnp.allclose(loss, ref, rtol=1e-5, atol=1e-6), (loss, ref)

    print("KERNEL_OK")
</pallas_src>

<mosaic_0001>
module attributes {stable_mosaic.version = 11 : i64} {
  func.func @_std_loss_kernel(%arg0: i32, %arg1: memref<1x4x16x128xf32, #tpu.memory_space<vmem>>, %arg2: memref<1x1xf32, #tpu.memory_space<vmem>>, %arg3: memref<16x128xf32, #tpu.memory_space<vmem>>) attributes {dimension_semantics = [#tpu.dimension_semantics<arbitrary>], iteration_bounds = array<i64: 1>, scalar_prefetch = 0 : i64, scratch_operands = 1 : i64, tpu.core_type = #tpu.core_type<tc>, window_params = [{transform_indices = @transform_0, window_bounds = array<i64: 1, 4, 16, 128>}, {pipeline_mode = #tpu.pipeline_mode<synchronous>, transform_indices = @transform_1, window_bounds = array<i64: 1, 1>}]} {
    %c0_i32 = arith.constant 0 : i32
    %0 = arith.cmpi eq, %arg0, %c0_i32 : i32
    %1 = arith.extui %0 : i1 to i32
    %c0_i32_0 = arith.constant 0 : i32
    %2 = arith.cmpi ne, %1, %c0_i32_0 : i32
    scf.if %2 {
      %cst_37 = arith.constant 0.000000e+00 : f32
      %87 = vector.broadcast %cst_37 : f32 to vector<16x128xf32>
      %c0_38 = arith.constant 0 : index
      %c0_39 = arith.constant 0 : index
      %88 = vector.load %arg3[%c0_38, %c0_39] : memref<16x128xf32, #tpu.memory_space<vmem>>, vector<16x128xf32>
      tpu.vector_store %arg3[%c0_38, %c0_39], %87 {strides = array<i32>} : memref<16x128xf32, #tpu.memory_space<vmem>>, vector<16x128xf32>,
    } else {
    }
    %c0 = arith.constant 0 : index
    %c0_1 = arith.constant 0 : index
    %c0_2 = arith.constant 0 : index
    %c0_3 = arith.constant 0 : index
    %3 = vector.load %arg1[%c0, %c0_1, %c0_2, %c0_3] : memref<1x4x16x128xf32, #tpu.memory_space<vmem>>, vector<1x1x16x128xf32>
    %4 = vector.shape_cast %3 : vector<1x1x16x128xf32> to vector<16x128xf32>
    %c0_4 = arith.constant 0 : index
    %c1 = arith.constant 1 : index
    %c0_5 = arith.constant 0 : index
    %c0_6 = arith.constant 0 : index
    %5 = vector.load %arg1[%c0_4, %c1, %c0_5, %c0_6] : memref<1x4x16x128xf32, #tpu.memory_space<vmem>>, vector<1x1x16x128xf32>
    %6 = vector.shape_cast %5 : vector<1x1x16x128xf32> to vector<16x128xf32>
    %7 = arith.addf %4, %6 : vector<16x128xf32>
    %c0_7 = arith.constant 0 : index
    %c2 = arith.constant 2 : index
    %c0_8 = arith.constant 0 : index
    %c0_9 = arith.constant 0 : index
    %8 = vector.load %arg1[%c0_7, %c2, %c0_8, %c0_9] : memref<1x4x16x128xf32, #tpu.memory_space<vmem>>, vector<1x1x16x128xf32>
    %9 = vector.shape_cast %8 : vector<1x1x16x128xf32> to vector<16x128xf32>
    %10 = arith.addf %7, %9 : vector<16x128xf32>
    %c0_10 = arith.constant 0 : index
    %c3 = arith.constant 3 : index
    %c0_11 = arith.constant 0 : index
    %c0_12 = arith.constant 0 : index
    %11 = vector.load %arg1[%c0_10, %c3, %c0_11, %c0_12] : memref<1x4x16x128xf32, #tpu.memory_space<vmem>>, vector<1x1x16x128xf32>
    %12 = vector.shape_cast %11 : vector<1x1x16x128xf32> to vector<16x128xf32>
    %13 = arith.addf %10, %12 : vector<16x128xf32>
    %c1_i32 = arith.constant 1 : i32
    %14 = tpu.dynamic_rotate %13 by %c1_i32 dim 0 : vector<16x128xf32>, i32 -> vector<16x128xf32>
    %15 = arith.addf %13, %14 : vector<16x128xf32>
    %c15_i32 = arith.constant 15 : i32
    %16 = tpu.dynamic_rotate %13 by %c15_i32 dim 0 : vector<16x128xf32>, i32 -> vector<16x128xf32>
    %17 = arith.addf %15, %16 : vector<16x128xf32>
    %c2_i32 = arith.constant 2 : i32
    %18 = tpu.dynamic_rotate %13 by %c2_i32 dim 0 : vector<16x128xf32>, i32 -> vector<16x128xf32>
    %19 = arith.addf %17, %18 : vector<16x128xf32>
    %c14_i32 = arith.constant 14 : i32
    %20 = tpu.dynamic_rotate %13 by %c14_i32 dim 0 : vector<16x128xf32>, i32 -> vector<16x128xf32>
    %21 = arith.addf %19, %20 : vector<16x128xf32>
    %c1_i32_13 = arith.constant 1 : i32
    %22 = tpu.dynamic_rotate %21 by %c1_i32_13 dim 1 : vector<16x128xf32>, i32 -> vector<16x128xf32>
    %23 = arith.addf %21, %22 : vector<16x128xf32>
    %c127_i32 = arith.constant 127 : i32
    %24 = tpu.dynamic_rotate %21 by %c127_i32 dim 1 : vector<16x128xf32>, i32 -> vector<16x128xf32>
    %25 = arith.addf %23, %24 : vector<16x128xf32>
    %c2_i32_14 = arith.constant 2 : i32
    %26 = tpu.dynamic_rotate %21 by %c2_i32_14 dim 1 : vector<16x128xf32>, i32 -> vector<16x128xf32>
    %27 = arith.addf %25, %26 : vector<16x128xf32>
    %c126_i32 = arith.constant 126 : i32
    %28 = tpu.dynamic_rotate %21 by %c126_i32 dim 1 : vector<16x128xf32>, i32 -> vector<16x128xf32>
    %29 = arith.addf %27, %28 : vector<16x128xf32>
    %30 = tpu.iota {dimensions = array<i32: 0>} : vector<16x128xi32>
    %c16_i32 = arith.constant 16 : i32
    %c0_i32_15 = arith.constant 0 : i32
    %31 = arith.cmpi eq, %c16_i32, %c0_i32_15 : i32
    %c1_i32_16 = arith.constant 1 : i32
    %32 = arith.select %31, %c1_i32_16, %c16_i32 : i32
    %33 = vector.broadcast %32 : i32 to vector<16x128xi32>
    %34 = arith.remsi %30, %33 : vector<16x128xi32>
    %c0_i32_17 = arith.constant 0 : i32
    %35 = vector.broadcast %c0_i32_17 : i32 to vector<16x128xi32>
    %36 = arith.cmpi ne, %34, %35 : vector<16x128xi32>
    %c0_i32_18 = arith.constant 0 : i32
    %37 = vector.broadcast %c0_i32_18 : i32 to vector<16x128xi32>
    %38 = arith.cmpi slt, %34, %37 : vector<16x128xi32>
    %c0_i32_19 = arith.constant 0 : i32
    %39 = arith.cmpi slt, %32, %c0_i32_19 : i32
    %40 = vector.broadcast %39 : i1 to vector<16x128xi1>
    %41 = vector.broadcast %40 : vector<16x128xi1> to vector<16x128xi1>
    %42 = arith.xori %38, %41 : vector<16x128xi1>
    %43 = arith.andi %42, %36 : vector<16x128xi1>
    %44 = vector.broadcast %32 : i32 to vector<16x128xi32>
    %45 = arith.addi %34, %44 : vector<16x128xi32>
    %46 = arith.select %43, %45, %34 : vector<16x128xi1>, vector<16x128xi32>
    %47 = tpu.iota {dimensions = array<i32: 1>} : vector<16x128xi32>
    %c16_i32_20 = arith.constant 16 : i32
    %c0_i32_21 = arith.constant 0 : i32
    %48 = arith.cmpi eq, %c16_i32_20, %c0_i32_21 : i32
    %c1_i32_22 = arith.constant 1 : i32
    %49 = arith.select %48, %c1_i32_22, %c16_i32_20 : i32
    %50 = vector.broadcast %49 : i32 to vector<16x128xi32>
    %51 = arith.remsi %47, %50 : vector<16x128xi32>
    %c0_i32_23 = arith.constant 0 : i32
    %52 = vector.broadcast %c0_i32_23 : i32 to vector<16x128xi32>
    %53 = arith.cmpi ne, %51, %52 : vector<16x128xi32>
    %c0_i32_24 = arith.constant 0 : i32
    %54 = vector.broadcast %c0_i32_24 : i32 to vector<16x128xi32>
    %55 = arith.cmpi slt, %51, %54 : vector<16x128xi32>
    %c0_i32_25 = arith.constant 0 : i32
    %56 = arith.cmpi slt, %49, %c0_i32_25 : i32
    %57 = vector.broadcast %56 : i1 to vector<16x128xi1>
    %58 = vector.broadcast %57 : vector<16x128xi1> to vector<16x128xi1>
    %59 = arith.xori %55, %58 : vector<16x128xi1>
    %60 = arith.andi %59, %53 : vector<16x128xi1>
    %61 = vector.broadcast %49 : i32 to vector<16x128xi32>
    %62 = arith.addi %51, %61 : vector<16x128xi32>
    %63 = arith.select %60, %62, %51 : vector<16x128xi1>, vector<16x128xi32>
    %c2_i32_26 = arith.constant 2 : i32
    %64 = vector.broadcast %c2_i32_26 : i32 to vector<16x128xi32>
    %65 = arith.cmpi sge, %46, %64 : vector<16x128xi32>
    %c14_i32_27 = arith.constant 14 : i32
    %66 = vector.broadcast %c14_i32_27 : i32 to vector<16x128xi32>
    %67 = arith.cmpi slt, %46, %66 : vector<16x128xi32>
    %68 = arith.andi %65, %67 : vector<16x128xi1>
    %c2_i32_28 = arith.constant 2 : i32
    %69 = vector.broadcast %c2_i32_28 : i32 to vector<16x128xi32>
    %70 = arith.cmpi sge, %63, %69 : vector<16x128xi32>
    %71 = arith.andi %68, %70 : vector<16x128xi1>
    %c14_i32_29 = arith.constant 14 : i32
    %72 = vector.broadcast %c14_i32_29 : i32 to vector<16x128xi32>
    %73 = arith.cmpi slt, %63, %72 : vector<16x128xi32>
    %74 = arith.andi %71, %73 : vector<16x128xi1>
    %cst = arith.constant 4.000000e-02 : f32
    %75 = vector.broadcast %cst : f32 to vector<16x128xf32>
    %76 = arith.mulf %29, %75 : vector<16x128xf32>
    %77 = arith.subf %13, %76 : vector<16x128xf32>
    %cst_30 = arith.constant 0.000000e+00 : f32
    %78 = vector.broadcast %cst_30 : f32 to vector<16x128xf32>
    %79 = arith.select %74, %77, %78 : vector<16x128xi1>, vector<16x128xf32>
    %c0_31 = arith.constant 0 : index
    %c0_32 = arith.constant 0 : index
    %80 = vector.load %arg3[%c0_31, %c0_32] : memref<16x128xf32, #tpu.memory_space<vmem>>, vector<16x128xf32>
    %81 = arith.mulf %79, %79 : vector<16x128xf32>
    %82 = arith.addf %80, %81 : vector<16x128xf32>
    %c0_33 = arith.constant 0 : index
    %c0_34 = arith.constant 0 : index
    %83 = vector.load %arg3[%c0_33, %c0_34] : memref<16x128xf32, #tpu.memory_space<vmem>>, vector<16x128xf32>
    tpu.vector_store %arg3[%c0_33, %c0_34], %82 {strides = array<i32>} : memref<16x128xf32, #tpu.memory_space<vmem>>, vector<16x128xf32>,
    %c0_i32_35 = arith.constant 0 : i32
    %84 = arith.cmpi eq, %arg0, %c0_i32_35 : i32
    %85 = arith.extui %84 : i1 to i32
    %c0_i32_36 = arith.constant 0 : i32
    %86 = arith.cmpi ne, %85, %c0_i32_36 : i32
    scf.if %86 {
      %c0_37 = arith.constant 0 : index
      %c0_38 = arith.constant 0 : index
      %87 = vector.load %arg3[%c0_37, %c0_38] : memref<16x128xf32, #tpu.memory_space<vmem>>, vector<16x128xf32>
      %88 = vector.shape_cast %87 : vector<16x128xf32> to vector<1x16x128xf32>
      %cst_39 = arith.constant dense<0.000000e+00> : vector<1xf32>
      %89 = vector.multi_reduction <add>, %88, %cst_39 [1, 2] : vector<1x16x128xf32> to vector<1xf32>
      %90 = vector.shape_cast %89 : vector<1xf32> to vector<1x1x1xf32>
      %91 = vector.extract %90[0, 0, 0] : f32 from vector<1x1x1xf32>
      %92 = vector.broadcast %91 : f32 to vector<1x1xf32>
      %cst_40 = arith.constant 2.17013891E-4 : f32
      %93 = vector.broadcast %cst_40 : f32 to vector<1x1xf32>
      %94 = arith.mulf %92, %93 : vector<1x1xf32>
      %c0_41 = arith.constant 0 : index
      %c0_42 = arith.constant 0 : index
      %95 = vector.load %arg2[%c0_41, %c0_42] : memref<1x1xf32, #tpu.memory_space<vmem>>, vector<1x1xf32>
      tpu.vector_store %arg2[%c0_41, %c0_42], %94 {strides = array<i32>} : memref<1x1xf32, #tpu.memory_space<vmem>>, vector<1x1xf32>,
    } else {
    }
    return
  }
  func.func @transform_0(%arg0: i32) -> (i32, i32, i32, i32) {
    %c0_i32 = arith.constant 0 : i32
    %c0_i32_0 = arith.constant 0 : i32
    %c0_i32_1 = arith.constant 0 : i32
    %c0_i32_2 = arith.constant 0 : i32
    return %arg0, %c0_i32, %c0_i32_0, %c0_i32_1 : i32, i32, i32, i32
  }
  func.func @transform_1(%arg0: i32) -> (i32, i32) {
    %c0_i32 = arith.constant 0 : i32
    %c0_i32_0 = arith.constant 0 : i32
    %c0_i32_1 = arith.constant 0 : i32
    return %c0_i32, %c0_i32_0 : i32, i32
  }
}

</mosaic_0001>

<llo_original>
// kernel: std_loss.1
$region0: #{std_loss.1}
  #allocation0 [shape = 'u32[]', space=smem, size = 0x4, offset = 0x4, fixed_abs, tag = 'smem constant byte address 0x4 - core index']
  #allocation1 [shape = 'u32[72,128]{1,0:T(1,128)}', space=vmem, size = 0x9000, scoped, tag = 'internal scratch']
  #allocation2 [shape = 'f32[16,128]{1,0:T(8,128)}', space=vmem, size = 0x2000, scoped, tag = 'scratch operand']
  %s0 = inlined_call_operand.vmem [shape: f32[1,4,16,128], index: 0, kind: input, shape index: {}]
  %s1 = inlined_call_operand.hbm [shape: f32[1,1], index: 1, kind: output, shape index: {}]
  %s2 = sld [smem:[#allocation0]]
  $region22: #{std_loss.1} parent=0
    _
  %s4 = ssub.s32 1, %s2
  %s5 = scalar_select 0, %s4, %s2
  $region1: #{std_loss.1} parent=0
    #allocation3 [shape = 'u8[512]{0}', space=vmem, size = 0x400, scoped, tag = 'output window, operand 0, single buffered']
    #allocation4 [shape = 's32[1]{0}', space=sflag, size = 0x4, scoped, tag = 'scoped memory for std_loss.1']
    %6 = vsyncpa [#allocation4], 0
    // Predicated region
    $region2: #{std_loss.1} parent=1 // pred_check
      _
    $region3: #{std_loss.1} parent=1 // pred_check_branch
      %8 = sbr.rel (0) target = $region5
    $region4: #{std_loss.1} parent=1 // pred_region
      _
    $region5: #{std_loss.1} parent=1 // pred_fallthru
      _
    %p9 = scmp.eq.s32.totalorder 0, 0
    // Predicated region
    $region6: #{std_loss.1} parent=1 // pred_check
      %p10 = pneg %p9
    $region7: #{std_loss.1} parent=1 // pred_check_branch
      %12 = sbr.rel (%p10) target = $region9
    $region8: #{std_loss.1} parent=1 // pred_region
      %13 = vst [vmem:[#allocation2] sm:$0xff] 0.0
      %14 = vst [vmem:[#allocation2 + $0x8] sm:$0xff] 0.0
    $region9: #{std_loss.1} parent=1 // pred_fallthru
      _
    %v15 = vld [vmem:[%s0] sm:$0xff]
    %v16 = vld [vmem:[%s0 + $0x8] sm:$0xff]
    %s17 = scalar_lea.vmem %s0, 16
    %v18 = vld [vmem:[%s17] sm:$0xff]
    %v19 = vld [vmem:[%s17 + $0x8] sm:$0xff]
    %v20 = vadd.f32 %v15, %v18
    %v21 = vadd.f32 %v16, %v19
    %s22 = scalar_lea.vmem %s0, 32
    %v23 = vld [vmem:[%s22] sm:$0xff]
    %v24 = vld [vmem:[%s22 + $0x8] sm:$0xff]
    %v25 = vadd.f32 %v20, %v23
    %v26 = vadd.f32 %v21, %v24
    %s27 = scalar_lea.vmem %s0, 48
    %v28 = vld [vmem:[%s27] sm:$0xff]
    %v29 = vld [vmem:[%s27 + $0x8] sm:$0xff]
    %v30 = vadd.f32 %v25, %v28
    %v31 = vadd.f32 %v26, %v29
    %v32 = vrot.slane %v30, 7
    %v33 = vrot.slane %v31, 7
    %v34 = vlaneseq
    %v35 = vshrl.u32 %v34, 7
    %vm36 = vcmp.lt.s32.totalorder %v35, 1
    %v37 = vsel %vm36, %v32, %v33
    %v38 = vsel %vm36, %v33, %v32
    %v39 = vadd.f32 %v30, %v38
    %v40 = vadd.f32 %v31, %v37
    %v41 = vrot.slane %v30, 1
    %v42 = vrot.slane %v31, 1
    %vm43 = vcmp.lt.s32.totalorder %v35, 7
    %v44 = vsel %vm43, %v41, %v42
    %v45 = vsel %vm43, %v42, %v41
    %v46 = vadd.f32 %v39, %v44
    %v47 = vadd.f32 %v40, %v45
    %v48 = vrot.slane %v30, 6
    %v49 = vrot.slane %v31, 6
    %vm50 = vcmp.lt.s32.totalorder %v35, 2
    %v51 = vsel %vm50, %v48, %v49
    %v52 = vsel %vm50, %v49, %v48
    %v53 = vadd.f32 %v46, %v52
    %v54 = vadd.f32 %v47, %v51
    %v55 = vrot.slane %v30, 2
    %v56 = vrot.slane %v31, 2
    %vm57 = vcmp.lt.s32.totalorder %v35, 6
    %v58 = vsel %vm57, %v55, %v56
    %v59 = vsel %vm57, %v56, %v55
    %v60 = vadd.f32 %v53, %v58
    %v61 = vadd.f32 %v54, %v59
    %62 = vrot.lane.b32.xlu0 %v60, 1
    %v63 = vpop.permute.xlu0 %62
    %64 = vrot.lane.b32.xlu0 %v61, 1
    %v65 = vpop.permute.xlu0 %64
    %v66 = vadd.f32 %v60, %v63
    %v67 = vadd.f32 %v61, %v65
    %68 = vrot.lane.b32.xlu0 %v60, 127
    %v69 = vpop.permute.xlu0 %68
    %70 = vrot.lane.b32.xlu0 %v61, 127
    %v71 = vpop.permute.xlu0 %70
    %v72 = vadd.f32 %v66, %v69
    %v73 = vadd.f32 %v67, %v71
    %74 = vrot.lane.b32.xlu0 %v60, 2
    %v75 = vpop.permute.xlu0 %74
    %76 = vrot.lane.b32.xlu0 %v61, 2
    %v77 = vpop.permute.xlu0 %76
    %v78 = vadd.f32 %v72, %v75
    %v79 = vadd.f32 %v73, %v77
    %80 = vrot.lane.b32.xlu0 %v60, 126
    %v81 = vpop.permute.xlu0 %80
    %82 = vrot.lane.b32.xlu0 %v61, 126
    %v83 = vpop.permute.xlu0 %82
    %v84 = vadd.f32 %v78, %v81
    %v85 = vadd.f32 %v79, %v83
    %v86 = vadd.s32 %v35, 8
    %vm87 = vcmp.lt.s32.totalorder %v35, 0
    %v88 = vsub.s32 0, %v35
    %v89 = vsel %vm87, %v88, %v35
    %v90 = vshrl.u32 %v89, 4
    %v91 = vand.u32 %v89, 15
    %v92 = vsub.s32 0, %v91
    %v93 = vsel %vm87, %v92, %v91
    %vm94 = vcmp.lt.s32.totalorder %v86, 0
    %v95 = vsub.s32 0, %v86
    %v96 = vsel %vm94, %v95, %v86
    %v97 = vshrl.u32 %v96, 4
    %v98 = vand.u32 %v96, 15
    %v99 = vsub.s32 0, %v98
    %v100 = vsel %vm94, %v99, %v98
    %vm101 = vcmp.ne.s32.totalorder %v93, 0
    %vm102 = vcmp.ne.s32.totalorder %v100, 0
    %vm103 = vcmp.lt.s32.totalorder %v93, 0
    %vm104 = vcmp.lt.s32.totalorder %v100, 0
    %vm105 = vmand %vm103, %vm101
    %vm106 = vmand %vm104, %vm102
    %v107 = vadd.s32 %v93, 16
    %v108 = vadd.s32 %v100, 16
    %v109 = vsel %vm105, %v107, %v93
    %v110 = vsel %vm106, %v108, %v100
    %v111 = vlaneseq
    %v112 = vand.u32 %v111, 127
    %vm113 = vcmp.lt.s32.totalorder %v112, 0
    %v114 = vsub.s32 0, %v112
    %v115 = vsel %vm113, %v114, %v112
    %v116 = vshrl.u32 %v115, 4
    %v117 = vand.u32 %v115, 15
    %v118 = vsub.s32 0, %v117
    %v119 = vsel %vm113, %v118, %v117
    %vm120 = vcmp.ne.s32.totalorder %v119, 0
    %vm121 = vcmp.lt.s32.totalorder %v119, 0
    %vm122 = vmand %vm121, %vm120
    %v123 = vadd.s32 %v119, 16
    %v124 = vsel %vm122, %v123, %v119
    %vm125 = vcmp.ge.s32.totalorder %v109, 2
    %vm126 = vcmp.ge.s32.totalorder %v110, 2
    %vm127 = vcmp.lt.s32.totalorder %v109, 14
    %vm128 = vcmp.lt.s32.totalorder %v110, 14
    %vm129 = vmand %vm125, %vm127
    %vm130 = vmand %vm126, %vm128
    %vm131 = vcmp.ge.s32.totalorder %v124, 2
    %vm132 = vmand %vm129, %vm131
    %vm133 = vmand %vm130, %vm131
    %vm134 = vcmp.lt.s32.totalorder %v124, 14
    %vm135 = vmand %vm132, %vm134
    %vm136 = vmand %vm133, %vm134
    %v137 = vmul.f32 %v84, 0.04
    %v138 = vmul.f32 %v85, 0.04
    %v139 = vsub.f32 %v30, %v137
    %v140 = vsub.f32 %v31, %v138
    %v141 = vsel %vm135, %v139, 0.0
    %v142 = vsel %vm136, %v140, 0.0
    %v143 = vld [vmem:[#allocation2] sm:$0xff]
    %v144 = vld [vmem:[#allocation2 + $0x8] sm:$0xff]
    %v145 = vmul.f32 %v141, %v141
    %v146 = vmul.f32 %v142, %v142
    %v147 = vadd.f32 %v143, %v145
    %v148 = vadd.f32 %v144, %v146
    %149 = vst [vmem:[#allocation2] sm:$0xff] %v147
    %150 = vst [vmem:[#allocation2 + $0x8] sm:$0xff] %v148
    // Predicated region
    $region10: #{std_loss.1} parent=1 // pred_check
      %p151 = pneg %p9
    $region11: #{std_loss.1} parent=1 // pred_check_branch
      %153 = sbr.rel (%p151) target = $region13
    $region12: #{std_loss.1} parent=1 // pred_region
      %v154 = vld [vmem:[#allocation2] sm:$0xff]
      %v155 = vld [vmem:[#allocation2 + $0x8] sm:$0xff]
      %v156 = vadd.f32 %v154, %v155
      %157 = vadd.xlane.f32.xlu0 %v156
      %v158 = vpop.xlane.xlu0 %157
      %v159 = vrot.slane %v158, 4
      %v160 = vadd.f32 %v158, %v159
      %v161 = vrot.slane %v160, 2
      %v162 = vadd.f32 %v160, %v161
      %v163 = vrot.slane %v162, 1
      %v164 = vadd.f32 %v162, %v163
      %s165 = vtos %v164
      %v166 = vstv %s165
      %v167 = vmul.f32 %v166, 0.00021701389
      %vm168 = vcmask 0
      %169 = vst.msk [vmem:[#allocation3] sm:$0x1] %vm168, %v167
    $region13: #{std_loss.1} parent=1 // pred_fallthru
      _
    // Predicated region
    $region14: #{std_loss.1} parent=1 // pred_check
      _
    $region15: #{std_loss.1} parent=1 // pred_check_branch
      %171 = sbr.rel (0) target = $region17
    $region16: #{std_loss.1} parent=1 // pred_region
      %173 = vsyncadd [#allocation4], 0
      %s175 = sshll.u32 [#allocation3], 4
      %s176 = int_to_ptr.vmem [resolvable:$true] %s175
      %s177 = sshll.u32 %s1, 4
      %s178 = int_to_ptr.hbm [resolvable:$true] %s177
      %180 = dma.vmem_to_hbm [thread:$0]  %s176, 16, %s178, [#allocation4]
    $region17: #{std_loss.1} parent=1 // pred_fallthru
      _
    // Predicated region
    $region18: #{std_loss.1} parent=1 // pred_check
      _
    $region19: #{std_loss.1} parent=1 // pred_check_branch
      %182 = sbr.rel (0) target = $region21
    $region20: #{std_loss.1} parent=1 // pred_region
      %184 = dma.done [#allocation4], 16
    $region21: #{std_loss.1} parent=1 // pred_fallthru
      _
    %185 = vsyncpa [#allocation4], 1

</llo_original>
